<compile_context>
chip_gen: v7x
topology: tpu7x:2x2x1
jax: 0.10.0
libtpu: 0.0.40
codegen_flags: <defaults>
</compile_context>

<pallas_src>
import jax
import jax.numpy as jnp
from jax.experimental import pallas as pl
from jax.experimental.pallas import tpu as pltpu

GAMMA = 2.0  # module default


def _pick_tile_n(n, c, itemsize):
    """Batch-tile (lane) size: full extent for small N, else a multiple of 128
    kept small enough that double-buffering stays well under v7x scoped VMEM."""
    if n <= 128:
        return n                      # block last dim == full array dim: allowed
    budget = 8 << 20                  # per-buffer budget (x2 buffers << 32 MiB)
    max_lanes = max(budget // max(c * max(itemsize, 1), 1), 128)
    max_lanes = min(max_lanes, 1024)
    return int((max_lanes // 128) * 128)


def _make_kernel(n_true, tile_n, gamma):
    assert gamma == 2.0, "kernel specializes gamma=2 (module default) as a square"
    inv_n = 1.0 / float(n_true)       # static: no runtime divide needed

    def kernel(x_ref, t_ref, a_ref, out_ref, acc_ref):
        i = pl.program_id(0)

        @pl.when(i == 0)
        def _init():
            acc_ref[...] = jnp.zeros_like(acc_ref)

        x = x_ref[...].astype(jnp.float32)     # (C, T) classes x batch-lanes
        t = t_ref[...]                          # (1, T) int32 class ids
        a = a_ref[...]                          # (1, T) f32, alpha[targets]

        # Per-column (per-sample) logsumexp over the class (sublane) axis.
        m = jnp.max(x, axis=0, keepdims=True)                  # (1, T)
        e = jnp.exp(x - m)                                      # (C, T)
        s = jnp.sum(e, axis=0, keepdims=True)                   # (1, T)

        # Gather the target-class logit via a one-hot select + sublane reduce.
        cls = jax.lax.broadcasted_iota(jnp.int32, x.shape, 0)   # (C, T)
        x_t = jnp.sum(jnp.where(cls == t, x, 0.0),
                      axis=0, keepdims=True)                    # (1, T)

        log_p = (x_t - m) - jnp.log(s)                          # stable log prob
        probs = jnp.exp(log_p)
        one_minus = 1.0 - probs
        loss = -a * (one_minus * one_minus) * log_p             # gamma == 2

        # Mask lanes past the true batch size (partial last tile).
        lane = jax.lax.broadcasted_iota(jnp.int32, loss.shape, 1)
        valid = (i * tile_n + lane) < n_true
        loss = jnp.where(valid, loss, 0.0)

        acc_ref[...] += jnp.sum(loss, axis=1, keepdims=True)    # (1, 1)

        @pl.when(i == pl.num_programs(0) - 1)
        def _finalize():
            out_ref[...] = acc_ref[...] * inv_n                 # mean (size_average)

    return kernel


def focal_loss(logits, targets, alpha, gamma=GAMMA):
    """logits: (N, C) float; targets: (N,) int; alpha: (C,) float -> scalar f32."""
    n, c = logits.shape
    itemsize = jnp.dtype(logits.dtype).itemsize

    # Lane-dense layout plumbing (batch -> lanes). Keep the source dtype.
    x_t = jnp.transpose(logits)                                   # (C, N)
    tgt = targets.reshape(1, n).astype(jnp.int32)                 # (1, N)
    a_n = alpha.reshape(-1)[targets].reshape(1, n).astype(jnp.float32)  # (1, N)

    tile_n = _pick_tile_n(n, c, itemsize)
    grid = (pl.cdiv(n, tile_n),)

    bytes_per_step = c * tile_n * itemsize + 2 * tile_n * 4
    vmem_limit = int(min(max(4 * bytes_per_step + (2 << 20), 4 << 20), 96 << 20))

    cost = pl.CostEstimate(
        flops=int(8 * n * c),
        transcendentals=int(n * c + 3 * n),          # exp(N*C) + log/exp per row
        bytes_accessed=int(n * c * itemsize + 8 * n + 4),
    )

    out = pl.pallas_call(
        _make_kernel(n, tile_n, gamma),
        out_shape=jax.ShapeDtypeStruct((1, 1), jnp.float32),
        grid=grid,
        in_specs=[
            pl.BlockSpec((c, tile_n), lambda i: (0, i)),   # logits^T tile
            pl.BlockSpec((1, tile_n), lambda i: (0, i)),   # targets tile
            pl.BlockSpec((1, tile_n), lambda i: (0, i)),   # alpha[targets] tile
        ],
        out_specs=pl.BlockSpec((1, 1), lambda i: (0, 0)),
        scratch_shapes=[pltpu.VMEM((1, 1), jnp.float32)],  # running loss sum
        compiler_params=pltpu.CompilerParams(
            dimension_semantics=("arbitrary",),            # accumulator axis
            vmem_limit_bytes=vmem_limit,
        ),
        cost_estimate=cost,
    )(x_t, tgt, a_n)
    return out[0, 0]


def focal_loss_ref(logits, targets, alpha, gamma=GAMMA):
    """Pure-JAX reference matching the PyTorch forward (size_average=True)."""
    p = jax.nn.softmax(logits, axis=1)
    probs = jnp.take_along_axis(p, targets.reshape(-1, 1), axis=1)   # (N, 1)
    a = alpha[targets].reshape(-1, 1)
    batch_loss = -a * jnp.power(1.0 - probs, gamma) * jnp.log(probs)
    return jnp.mean(batch_loss)


if __name__ == "__main__":
    key = jax.random.PRNGKey(0)
    # Small shapes; N=200 with TILE_N=128 exercises the streaming grid and the
    # partial-tile masking path (grid=(2,), last tile has 72 valid lanes).
    N, C = 200, 10

    k1, k2 = jax.random.split(key)
    logits = jax.random.normal(k1, (N, C), dtype=jnp.float32)
    targets = jax.random.randint(k2, (N,), 0, C, dtype=jnp.int32)
    # Module __init__ default: alpha = torch.ones(class_num, 1).
    alpha = jnp.ones((C,), dtype=jnp.float32)

    loss = focal_loss(logits, targets, alpha)
    jax.block_until_ready(loss)

    ref = focal_loss_ref(logits, targets, alpha)
    assert jnp.allclose(loss, ref, rtol=1e-5, atol=1e-5), (loss, ref)

    print("KERNEL_OK")
</pallas_src>

<mosaic_0001>
module attributes {stable_mosaic.version = 11 : i64} {
  func.func @kernel(%arg0: i32, %arg1: memref<10x1024xf32, #tpu.memory_space<vmem>>, %arg2: memref<1x1024xi32, #tpu.memory_space<vmem>>, %arg3: memref<1x1024xf32, #tpu.memory_space<vmem>>, %arg4: memref<1x1xf32, #tpu.memory_space<vmem>>, %arg5: memref<1x1xf32, #tpu.memory_space<vmem>>) attributes {dimension_semantics = [#tpu.dimension_semantics<arbitrary>], iteration_bounds = array<i64: 1>, scalar_prefetch = 0 : i64, scratch_operands = 1 : i64, tpu.core_type = #tpu.core_type<tc>, window_params = [{transform_indices = @transform_0, window_bounds = array<i64: 10, 1024>}, {transform_indices = @transform_1, window_bounds = array<i64: 1, 1024>}, {transform_indices = @transform_2, window_bounds = array<i64: 1, 1024>}, {pipeline_mode = #tpu.pipeline_mode<synchronous>, transform_indices = @transform_3, window_bounds = array<i64: 1, 1>}]} {
    %c0_i32 = arith.constant 0 : i32
    %0 = arith.cmpi eq, %arg0, %c0_i32 : i32
    %1 = arith.extui %0 : i1 to i32
    %c0_i32_0 = arith.constant 0 : i32
    %2 = arith.cmpi ne, %1, %c0_i32_0 : i32
    scf.if %2 {
      %cst_19 = arith.constant 0.000000e+00 : f32
      %47 = vector.broadcast %cst_19 : f32 to vector<1x1xf32>
      %c0_20 = arith.constant 0 : index
      %c0_21 = arith.constant 0 : index
      %48 = vector.load %arg5[%c0_20, %c0_21] : memref<1x1xf32, #tpu.memory_space<vmem>>, vector<1x1xf32>
      tpu.vector_store %arg5[%c0_20, %c0_21], %47 {strides = array<i32>} : memref<1x1xf32, #tpu.memory_space<vmem>>, vector<1x1xf32>,
    } else {
    }
    %c0 = arith.constant 0 : index
    %c0_1 = arith.constant 0 : index
    %3 = vector.load %arg1[%c0, %c0_1] : memref<10x1024xf32, #tpu.memory_space<vmem>>, vector<10x1024xf32>
    %c0_2 = arith.constant 0 : index
    %c0_3 = arith.constant 0 : index
    %4 = vector.load %arg2[%c0_2, %c0_3] : memref<1x1024xi32, #tpu.memory_space<vmem>>, vector<1x1024xi32>
    %c0_4 = arith.constant 0 : index
    %c0_5 = arith.constant 0 : index
    %5 = vector.load %arg3[%c0_4, %c0_5] : memref<1x1024xf32, #tpu.memory_space<vmem>>, vector<1x1024xf32>
    %cst = arith.constant dense<0xFF800000> : vector<1024xf32>
    %6 = vector.multi_reduction <maximumf>, %3, %cst [0] : vector<10x1024xf32> to vector<1024xf32>
    %7 = vector.shape_cast %6 : vector<1024xf32> to vector<1x1024xf32>
    %8 = vector.broadcast %7 : vector<1x1024xf32> to vector<10x1024xf32>
    %9 = arith.subf %3, %8 : vector<10x1024xf32>
    %10 = math.exp %9 : vector<10x1024xf32>
    %cst_6 = arith.constant dense<0.000000e+00> : vector<1024xf32>
    %11 = vector.multi_reduction <add>, %10, %cst_6 [0] : vector<10x1024xf32> to vector<1024xf32>
    %12 = vector.shape_cast %11 : vector<1024xf32> to vector<1x1024xf32>
    %13 = tpu.iota {dimensions = array<i32: 0>} : vector<10x1024xi32>
    %14 = vector.broadcast %4 : vector<1x1024xi32> to vector<10x1024xi32>
    %15 = arith.cmpi eq, %13, %14 : vector<10x1024xi32>
    %cst_7 = arith.constant 0.000000e+00 : f32
    %16 = vector.broadcast %cst_7 : f32 to vector<10x1024xf32>
    %17 = arith.select %15, %3, %16 : vector<10x1024xi1>, vector<10x1024xf32>
    %cst_8 = arith.constant dense<0.000000e+00> : vector<1024xf32>
    %18 = vector.multi_reduction <add>, %17, %cst_8 [0] : vector<10x1024xf32> to vector<1024xf32>
    %19 = vector.shape_cast %18 : vector<1024xf32> to vector<1x1024xf32>
    %20 = arith.subf %19, %7 : vector<1x1024xf32>
    %21 = math.log %12 : vector<1x1024xf32>
    %22 = arith.subf %20, %21 : vector<1x1024xf32>
    %23 = math.exp %22 : vector<1x1024xf32>
    %cst_9 = arith.constant 1.000000e+00 : f32
    %24 = vector.broadcast %cst_9 : f32 to vector<1x1024xf32>
    %25 = arith.subf %24, %23 : vector<1x1024xf32>
    %cst_10 = arith.constant 0.000000e+00 : f32
    %26 = vector.broadcast %cst_10 : f32 to vector<1x1024xf32>
    %27 = arith.subf %26, %5 : vector<1x1024xf32>
    %28 = arith.mulf %25, %25 : vector<1x1024xf32>
    %29 = arith.mulf %27, %28 : vector<1x1024xf32>
    %30 = arith.mulf %29, %22 : vector<1x1024xf32>
    %31 = tpu.iota {dimensions = array<i32: 1>} : vector<1x1024xi32>
    %c1024_i32 = arith.constant 1024 : i32
    %32 = arith.muli %arg0, %c1024_i32 : i32
    %33 = vector.broadcast %32 : i32 to vector<1x1024xi32>
    %34 = arith.addi %33, %31 : vector<1x1024xi32>
    %c200_i32 = arith.constant 200 : i32
    %35 = vector.broadcast %c200_i32 : i32 to vector<1x1024xi32>
    %36 = arith.cmpi slt, %34, %35 : vector<1x1024xi32>
    %cst_11 = arith.constant 0.000000e+00 : f32
    %37 = vector.broadcast %cst_11 : f32 to vector<1x1024xf32>
    %38 = arith.select %36, %30, %37 : vector<1x1024xi1>, vector<1x1024xf32>
    %c0_12 = arith.constant 0 : index
    %c0_13 = arith.constant 0 : index
    %39 = vector.load %arg5[%c0_12, %c0_13] : memref<1x1xf32, #tpu.memory_space<vmem>>, vector<1x1xf32>
    %cst_14 = arith.constant dense<0.000000e+00> : vector<1xf32>
    %40 = vector.multi_reduction <add>, %38, %cst_14 [1] : vector<1x1024xf32> to vector<1xf32>
    %41 = vector.shape_cast %40 : vector<1xf32> to vector<1x1xf32>
    %42 = arith.addf %39, %41 : vector<1x1xf32>
    %c0_15 = arith.constant 0 : index
    %c0_16 = arith.constant 0 : index
    %43 = vector.load %arg5[%c0_15, %c0_16] : memref<1x1xf32, #tpu.memory_space<vmem>>, vector<1x1xf32>
    tpu.vector_store %arg5[%c0_15, %c0_16], %42 {strides = array<i32>} : memref<1x1xf32, #tpu.memory_space<vmem>>, vector<1x1xf32>,
    %c0_i32_17 = arith.constant 0 : i32
    %44 = arith.cmpi eq, %arg0, %c0_i32_17 : i32
    %45 = arith.extui %44 : i1 to i32
    %c0_i32_18 = arith.constant 0 : i32
    %46 = arith.cmpi ne, %45, %c0_i32_18 : i32
    scf.if %46 {
      %c0_19 = arith.constant 0 : index
      %c0_20 = arith.constant 0 : index
      %47 = vector.load %arg5[%c0_19, %c0_20] : memref<1x1xf32, #tpu.memory_space<vmem>>, vector<1x1xf32>
      %cst_21 = arith.constant 5.000000e-03 : f32
      %48 = vector.broadcast %cst_21 : f32 to vector<1x1xf32>
      %49 = arith.mulf %47, %48 : vector<1x1xf32>
      %c0_22 = arith.constant 0 : index
      %c0_23 = arith.constant 0 : index
      %50 = vector.load %arg4[%c0_22, %c0_23] : memref<1x1xf32, #tpu.memory_space<vmem>>, vector<1x1xf32>
      tpu.vector_store %arg4[%c0_22, %c0_23], %49 {strides = array<i32>} : memref<1x1xf32, #tpu.memory_space<vmem>>, vector<1x1xf32>,
    } else {
    }
    return
  }
  func.func @transform_0(%arg0: i32) -> (i32, i32) {
    %c0_i32 = arith.constant 0 : i32
    %c0_i32_0 = arith.constant 0 : i32
    return %c0_i32, %arg0 : i32, i32
  }
  func.func @transform_1(%arg0: i32) -> (i32, i32) {
    %c0_i32 = arith.constant 0 : i32
    %c0_i32_0 = arith.constant 0 : i32
    return %c0_i32, %arg0 : i32, i32
  }
  func.func @transform_2(%arg0: i32) -> (i32, i32) {
    %c0_i32 = arith.constant 0 : i32
    %c0_i32_0 = arith.constant 0 : i32
    return %c0_i32, %arg0 : i32, i32
  }
  func.func @transform_3(%arg0: i32) -> (i32, i32) {
    %c0_i32 = arith.constant 0 : i32
    %c0_i32_0 = arith.constant 0 : i32
    %c0_i32_1 = arith.constant 0 : i32
    return %c0_i32, %c0_i32_0 : i32, i32
  }
}

</mosaic_0001>

<llo_original>
// kernel: tpu_custom_call.1
$region0: #{tpu_custom_call.1}
  #allocation0 [shape = 'u32[]', space=smem, size = 0x4, offset = 0x4, fixed_abs, tag = 'smem constant byte address 0x4 - core index']
  #allocation1 [shape = 'u32[144,128]{1,0:T(1,128)}', space=vmem, size = 0x12000, scoped, tag = 'internal scratch']
  #allocation2 [shape = 'f32[1,1]{1,0:T(1,128)}', space=vmem, size = 0x200, scoped, tag = 'scratch operand']
  %s0 = inlined_call_operand.hbm [shape: f32[10,200], index: 0, kind: input, shape index: {}]
  %s1 = inlined_call_operand.vmem [shape: s32[1,200], index: 1, kind: input, shape index: {}]
  %s2 = inlined_call_operand.vmem [shape: f32[1,200], index: 2, kind: input, shape index: {}]
  %s3 = inlined_call_operand.hbm [shape: f32[1,1], index: 3, kind: output, shape index: {}]
  %s4 = sld [smem:[#allocation0]]
  $region34: #{tpu_custom_call.1} parent=0
    _
  %s6 = ssub.s32 1, %s4
  %s7 = scalar_select 0, %s6, %s4
  $region1: #{tpu_custom_call.1} parent=0
    #allocation3 [shape = 'u8[65536]{0}', space=vmem, size = 0x10000, scoped, tag = 'input window, operand 0, single buffered']
    #allocation4 [shape = 's32[1]{0}', space=sflag, size = 0x4, scoped, tag = 'scoped memory for tpu_custom_call.1']
    #allocation5 [shape = 's32[1]{0}', space=sflag, size = 0x4, scoped, tag = 'scoped memory for tpu_custom_call.1']
    #allocation6 [shape = 'u8[512]{0}', space=vmem, size = 0x400, scoped, tag = 'output window, operand 0, single buffered']
    %8 = vsyncpa [#allocation4], 0
    %9 = vsyncpa [#allocation5], 0
    // Predicated region
    $region2: #{tpu_custom_call.1} parent=1 // pred_check
      _
    $region3: #{tpu_custom_call.1} parent=1 // pred_check_branch
      %11 = sbr.rel (0) target = $region5
    $region4: #{tpu_custom_call.1} parent=1 // pred_region
      %s13 = ssub.s32 2048, 512
      %14 = vsyncadd [#allocation4], %s13
      %s15 = sshll.u32 [#allocation3], 4
      %s16 = int_to_ptr.vmem [resolvable:$true] %s15
      %21 = dma.hbm_to_vmem [thread:$0]  %s0, 512, %s16, [#allocation4], 256, 1024, 16
    $region5: #{tpu_custom_call.1} parent=1 // pred_fallthru
      _
    // Predicated region
    $region6: #{tpu_custom_call.1} parent=1 // pred_check
      _
    $region7: #{tpu_custom_call.1} parent=1 // pred_check_branch
      %23 = sbr.rel (0) target = $region9
    $region8: #{tpu_custom_call.1} parent=1 // pred_region
      _
    $region9: #{tpu_custom_call.1} parent=1 // pred_fallthru
      _
    // Predicated region
    $region10: #{tpu_custom_call.1} parent=1 // pred_check
      _
    $region11: #{tpu_custom_call.1} parent=1 // pred_check_branch
      %25 = sbr.rel (0) target = $region13
    $region12: #{tpu_custom_call.1} parent=1 // pred_region
      _
    $region13: #{tpu_custom_call.1} parent=1 // pred_fallthru
      _
    // Predicated region
    $region14: #{tpu_custom_call.1} parent=1 // pred_check
      _
    $region15: #{tpu_custom_call.1} parent=1 // pred_check_branch
      %27 = sbr.rel (0) target = $region17
    $region16: #{tpu_custom_call.1} parent=1 // pred_region
      %28 = dma.done [#allocation4], 2048
    $region17: #{tpu_custom_call.1} parent=1 // pred_fallthru
      _
    %p29 = scmp.eq.s32.totalorder 0, 0
    // Predicated region
    $region18: #{tpu_custom_call.1} parent=1 // pred_check
      %p30 = pneg %p29
    $region19: #{tpu_custom_call.1} parent=1 // pred_check_branch
      %32 = sbr.rel (%p30) target = $region21
    $region20: #{tpu_custom_call.1} parent=1 // pred_region
      %vm33 = vcmask 0
      %34 = vst.msk [vmem:[#allocation2] sm:$0x1] %vm33, 0.0
    $region21: #{tpu_custom_call.1} parent=1 // pred_fallthru
      _
    %v35 = vld [vmem:[#allocation3] sm:$0xff]
    %v36 = vld [vmem:[#allocation3 + $0x8] sm:$0xff]
    %v37 = vld [vmem:[#allocation3 + $0x10] sm:$0xff]
    %v38 = vld [vmem:[#allocation3 + $0x18] sm:$0xff]
    %v39 = vld [vmem:[#allocation3 + $0x20] sm:$0xff]
    %v40 = vld [vmem:[#allocation3 + $0x28] sm:$0xff]
    %v41 = vld [vmem:[#allocation3 + $0x30] sm:$0xff]
    %v42 = vld [vmem:[#allocation3 + $0x38] sm:$0xff]
    %v43 = vld [vmem:[#allocation3 + $0x40] sm:$0x3]
    %v44 = vld [vmem:[#allocation3 + $0x48] sm:$0x3]
    %v45 = vld [vmem:[#allocation3 + $0x50] sm:$0x3]
    %v46 = vld [vmem:[#allocation3 + $0x58] sm:$0x3]
    %v47 = vld [vmem:[#allocation3 + $0x60] sm:$0x3]
    %v48 = vld [vmem:[#allocation3 + $0x68] sm:$0x3]
    %v49 = vld [vmem:[#allocation3 + $0x70] sm:$0x3]
    %v50 = vld [vmem:[#allocation3 + $0x78] sm:$0x3]
    %v51 = vld [vmem:[%s1] sm:$0xff]
    %v52 = vld [vmem:[%s2] sm:$0xff]
    %vm53 = vcmask 1041408
    %v54 = vsel %vm53, %v43, -inf
    %v55 = vmax.f32 %v35, %v54
    %v56 = vrot.slane %v55, 4
    %v57 = vmax.f32 %v55, %v56
    %v58 = vrot.slane %v57, 2
    %v59 = vmax.f32 %v57, %v58
    %v60 = vrot.slane %v59, 1
    %v61 = vmax.f32 %v59, %v60
    %v62 = vsel %vm53, %v44, -inf
    %v63 = vmax.f32 %v36, %v62
    %v64 = vrot.slane %v63, 4
    %v65 = vmax.f32 %v63, %v64
    %v66 = vrot.slane %v65, 2
    %v67 = vmax.f32 %v65, %v66
    %v68 = vrot.slane %v67, 1
    %v69 = vmax.f32 %v67, %v68
    %v70 = vsel %vm53, %v45, -inf
    %v71 = vmax.f32 %v37, %v70
    %v72 = vrot.slane %v71, 4
    %v73 = vmax.f32 %v71, %v72
    %v74 = vrot.slane %v73, 2
    %v75 = vmax.f32 %v73, %v74
    %v76 = vrot.slane %v75, 1
    %v77 = vmax.f32 %v75, %v76
    %v78 = vsel %vm53, %v46, -inf
    %v79 = vmax.f32 %v38, %v78
    %v80 = vrot.slane %v79, 4
    %v81 = vmax.f32 %v79, %v80
    %v82 = vrot.slane %v81, 2
    %v83 = vmax.f32 %v81, %v82
    %v84 = vrot.slane %v83, 1
    %v85 = vmax.f32 %v83, %v84
    %v86 = vsel %vm53, %v47, -inf
    %v87 = vmax.f32 %v39, %v86
    %v88 = vrot.slane %v87, 4
    %v89 = vmax.f32 %v87, %v88
    %v90 = vrot.slane %v89, 2
    %v91 = vmax.f32 %v89, %v90
    %v92 = vrot.slane %v91, 1
    %v93 = vmax.f32 %v91, %v92
    %v94 = vsel %vm53, %v48, -inf
    %v95 = vmax.f32 %v40, %v94
    %v96 = vrot.slane %v95, 4
    %v97 = vmax.f32 %v95, %v96
    %v98 = vrot.slane %v97, 2
    %v99 = vmax.f32 %v97, %v98
    %v100 = vrot.slane %v99, 1
    %v101 = vmax.f32 %v99, %v100
    %v102 = vsel %vm53, %v49, -inf
    %v103 = vmax.f32 %v41, %v102
    %v104 = vrot.slane %v103, 4
    %v105 = vmax.f32 %v103, %v104
    %v106 = vrot.slane %v105, 2
    %v107 = vmax.f32 %v105, %v106
    %v108 = vrot.slane %v107, 1
    %v109 = vmax.f32 %v107, %v108
    %v110 = vsel %vm53, %v50, -inf
    %v111 = vmax.f32 %v42, %v110
    %v112 = vrot.slane %v111, 4
    %v113 = vmax.f32 %v111, %v112
    %v114 = vrot.slane %v113, 2
    %v115 = vmax.f32 %v113, %v114
    %v116 = vrot.slane %v115, 1
    %v117 = vmax.f32 %v115, %v116
    %v118 = vsub.f32 %v35, %v61
    %v119 = vsub.f32 %v36, %v69
    %v120 = vsub.f32 %v37, %v77
    %v121 = vsub.f32 %v38, %v85
    %v122 = vsub.f32 %v39, %v93
    %v123 = vsub.f32 %v40, %v101
    %v124 = vsub.f32 %v41, %v109
    %v125 = vsub.f32 %v42, %v117
    %v126 = vsub.f32 %v43, %v61
    %v127 = vsub.f32 %v44, %v69
    %v128 = vsub.f32 %v45, %v77
    %v129 = vsub.f32 %v46, %v85
    %v130 = vsub.f32 %v47, %v93
    %v131 = vsub.f32 %v48, %v101
    %v132 = vsub.f32 %v49, %v109
    %v133 = vsub.f32 %v50, %v117
    %v134 = vmul.f32 %v118, 1.442695
    %v135 = vpow.pop %v134
    %v136 = vmul.f32 %v119, 1.442695
    %v137 = vpow.pop %v136
    %v138 = vmul.f32 %v120, 1.442695
    %v139 = vpow.pop %v138
    %v140 = vmul.f32 %v121, 1.442695
    %v141 = vpow.pop %v140
    %v142 = vmul.f32 %v122, 1.442695
    %v143 = vpow.pop %v142
    %v144 = vmul.f32 %v123, 1.442695
    %v145 = vpow.pop %v144
    %v146 = vmul.f32 %v124, 1.442695
    %v147 = vpow.pop %v146
    %v148 = vmul.f32 %v125, 1.442695
    %v149 = vpow.pop %v148
    %v150 = vmul.f32 %v126, 1.442695
    %v151 = vpow.pop %v150
    %v152 = vmul.f32 %v127, 1.442695
    %v153 = vpow.pop %v152
    %v154 = vmul.f32 %v128, 1.442695
    %v155 = vpow.pop %v154
    %v156 = vmul.f32 %v129, 1.442695
    %v157 = vpow.pop %v156
    %v158 = vmul.f32 %v130, 1.442695
    %v159 = vpow.pop %v158
    %v160 = vmul.f32 %v131, 1.442695
    %v161 = vpow.pop %v160
    %v162 = vmul.f32 %v132, 1.442695
    %v163 = vpow.pop %v162
    %v164 = vmul.f32 %v133, 1.442695
    %v165 = vpow.pop %v164
    %v166 = vsel %vm53, %v151, 0.0
    %v167 = vadd.f32 %v135, %v166
    %v168 = vrot.slane %v167, 4
    %v169 = vadd.f32 %v167, %v168
    %v170 = vrot.slane %v169, 2
    %v171 = vadd.f32 %v169, %v170
    %v172 = vrot.slane %v171, 1
    %v173 = vadd.f32 %v171, %v172
    %v174 = vsel %vm53, %v153, 0.0
    %v175 = vadd.f32 %v137, %v174
    %v176 = vrot.slane %v175, 4
    %v177 = vadd.f32 %v175, %v176
    %v178 = vrot.slane %v177, 2
    %v179 = vadd.f32 %v177, %v178
    %v180 = vrot.slane %v179, 1
    %v181 = vadd.f32 %v179, %v180
    %v182 = vsel %vm53, %v155, 0.0
    %v183 = vadd.f32 %v139, %v182
    %v184 = vrot.slane %v183, 4
    %v185 = vadd.f32 %v183, %v184
    %v186 = vrot.slane %v185, 2
    %v187 = vadd.f32 %v185, %v186
    %v188 = vrot.slane %v187, 1
    %v189 = vadd.f32 %v187, %v188
    %v190 = vsel %vm53, %v157, 0.0
    %v191 = vadd.f32 %v141, %v190
    %v192 = vrot.slane %v191, 4
    %v193 = vadd.f32 %v191, %v192
    %v194 = vrot.slane %v193, 2
    %v195 = vadd.f32 %v193, %v194
    %v196 = vrot.slane %v195, 1
    %v197 = vadd.f32 %v195, %v196
    %v198 = vsel %vm53, %v159, 0.0
    %v199 = vadd.f32 %v143, %v198
    %v200 = vrot.slane %v199, 4
    %v201 = vadd.f32 %v199, %v200
    %v202 = vrot.slane %v201, 2
    %v203 = vadd.f32 %v201, %v202
    %v204 = vrot.slane %v203, 1
    %v205 = vadd.f32 %v203, %v204
    %v206 = vsel %vm53, %v161, 0.0
    %v207 = vadd.f32 %v145, %v206
    %v208 = vrot.slane %v207, 4
    %v209 = vadd.f32 %v207, %v208
    %v210 = vrot.slane %v209, 2
    %v211 = vadd.f32 %v209, %v210
    %v212 = vrot.slane %v211, 1
    %v213 = vadd.f32 %v211, %v212
    %v214 = vsel %vm53, %v163, 0.0
    %v215 = vadd.f32 %v147, %v214
    %v216 = vrot.slane %v215, 4
    %v217 = vadd.f32 %v215, %v216
    %v218 = vrot.slane %v217, 2
    %v219 = vadd.f32 %v217, %v218
    %v220 = vrot.slane %v219, 1
    %v221 = vadd.f32 %v219, %v220
    %v222 = vsel %vm53, %v165, 0.0
    %v223 = vadd.f32 %v149, %v222
    %v224 = vrot.slane %v223, 4
    %v225 = vadd.f32 %v223, %v224
    %v226 = vrot.slane %v225, 2
    %v227 = vadd.f32 %v225, %v226
    %v228 = vrot.slane %v227, 1
    %v229 = vadd.f32 %v227, %v228
    %v230 = vlaneseq
    %v231 = vshrl.u32 %v230, 7
    %v232 = vadd.s32 %v231, 8
    %v233 = vlaneseq
    %v234 = vshrl.u32 %v233, 7
    %v235 = vsub.s32 0, %v234
    %v236 = vrot.slane %v51, %v235
    %v237 = vlaneseq
    %v238 = vshrl.u32 %v237, 7
    %v239 = vsub.s32 1, %v238
    %v240 = vrot.slane %v51, %v239
    %v241 = vlaneseq
    %v242 = vshrl.u32 %v241, 7
    %v243 = vsub.s32 2, %v242
    %v244 = vrot.slane %v51, %v243
    %v245 = vlaneseq
    %v246 = vshrl.u32 %v245, 7
    %v247 = vsub.s32 3, %v246
    %v248 = vrot.slane %v51, %v247
    %v249 = vlaneseq
    %v250 = vshrl.u32 %v249, 7
    %v251 = vsub.s32 4, %v250
    %v252 = vrot.slane %v51, %v251
    %v253 = vlaneseq
    %v254 = vshrl.u32 %v253, 7
    %v255 = vsub.s32 5, %v254
    %v256 = vrot.slane %v51, %v255
    %v257 = vlaneseq
    %v258 = vshrl.u32 %v257, 7
    %v259 = vsub.s32 6, %v258
    %v260 = vrot.slane %v51, %v259
    %v261 = vlaneseq
    %v262 = vshrl.u32 %v261, 7
    %v263 = vsub.s32 7, %v262
    %v264 = vrot.slane %v51, %v263
    %vm265 = vcmp.eq.s32.totalorder %v231, %v236
    %vm266 = vcmp.eq.s32.totalorder %v231, %v240
    %vm267 = vcmp.eq.s32.totalorder %v231, %v244
    %vm268 = vcmp.eq.s32.totalorder %v231, %v248
    %vm269 = vcmp.eq.s32.totalorder %v231, %v252
    %vm270 = vcmp.eq.s32.totalorder %v231, %v256
    %vm271 = vcmp.eq.s32.totalorder %v231, %v260
    %vm272 = vcmp.eq.s32.totalorder %v231, %v264
    %vm273 = vcmp.eq.s32.totalorder %v232, %v236
    %vm274 = vcmp.eq.s32.totalorder %v232, %v240
    %vm275 = vcmp.eq.s32.totalorder %v232, %v244
    %vm276 = vcmp.eq.s32.totalorder %v232, %v248
    %vm277 = vcmp.eq.s32.totalorder %v232, %v252
    %vm278 = vcmp.eq.s32.totalorder %v232, %v256
    %vm279 = vcmp.eq.s32.totalorder %v232, %v260
    %vm280 = vcmp.eq.s32.totalorder %v232, %v264
    %v281 = vsel %vm265, %v35, 0.0
    %v282 = vsel %vm266, %v36, 0.0
    %v283 = vsel %vm267, %v37, 0.0
    %v284 = vsel %vm268, %v38, 0.0
    %v285 = vsel %vm269, %v39, 0.0
    %v286 = vsel %vm270, %v40, 0.0
    %v287 = vsel %vm271, %v41, 0.0
    %v288 = vsel %vm272, %v42, 0.0
    %v289 = vsel %vm273, %v43, 0.0
    %v290 = vsel %vm274, %v44, 0.0
    %v291 = vsel %vm275, %v45, 0.0
    %v292 = vsel %vm276, %v46, 0.0
    %v293 = vsel %vm277, %v47, 0.0
    %v294 = vsel %vm278, %v48, 0.0
    %v295 = vsel %vm279, %v49, 0.0
    %v296 = vsel %vm280, %v50, 0.0
    %v297 = vsel %vm53, %v289, 0.0
    %v298 = vadd.f32 %v281, %v297
    %v299 = vrot.slane %v298, 4
    %v300 = vadd.f32 %v298, %v299
    %v301 = vrot.slane %v300, 2
    %v302 = vadd.f32 %v300, %v301
    %v303 = vrot.slane %v302, 1
    %v304 = vadd.f32 %v302, %v303
    %v305 = vsel %vm53, %v290, 0.0
    %v306 = vadd.f32 %v282, %v305
    %v307 = vrot.slane %v306, 4
    %v308 = vadd.f32 %v306, %v307
    %v309 = vrot.slane %v308, 2
    %v310 = vadd.f32 %v308, %v309
    %v311 = vrot.slane %v310, 1
    %v312 = vadd.f32 %v310, %v311
    %v313 = vsel %vm53, %v291, 0.0
    %v314 = vadd.f32 %v283, %v313
    %v315 = vrot.slane %v314, 4
    %v316 = vadd.f32 %v314, %v315
    %v317 = vrot.slane %v316, 2
    %v318 = vadd.f32 %v316, %v317
    %v319 = vrot.slane %v318, 1
    %v320 = vadd.f32 %v318, %v319
    %v321 = vsel %vm53, %v292, 0.0
    %v322 = vadd.f32 %v284, %v321
    %v323 = vrot.slane %v322, 4
    %v324 = vadd.f32 %v322, %v323
    %v325 = vrot.slane %v324, 2
    %v326 = vadd.f32 %v324, %v325
    %v327 = vrot.slane %v326, 1
    %v328 = vadd.f32 %v326, %v327
    %v329 = vsel %vm53, %v293, 0.0
    %v330 = vadd.f32 %v285, %v329
    %v331 = vrot.slane %v330, 4
    %v332 = vadd.f32 %v330, %v331
    %v333 = vrot.slane %v332, 2
    %v334 = vadd.f32 %v332, %v333
    %v335 = vrot.slane %v334, 1
    %v336 = vadd.f32 %v334, %v335
    %v337 = vsel %vm53, %v294, 0.0
    %v338 = vadd.f32 %v286, %v337
    %v339 = vrot.slane %v338, 4
    %v340 = vadd.f32 %v338, %v339
    %v341 = vrot.slane %v340, 2
    %v342 = vadd.f32 %v340, %v341
    %v343 = vrot.slane %v342, 1
    %v344 = vadd.f32 %v342, %v343
    %v345 = vsel %vm53, %v295, 0.0
    %v346 = vadd.f32 %v287, %v345
    %v347 = vrot.slane %v346, 4
    %v348 = vadd.f32 %v346, %v347
    %v349 = vrot.slane %v348, 2
    %v350 = vadd.f32 %v348, %v349
    %v351 = vrot.slane %v350, 1
    %v352 = vadd.f32 %v350, %v351
    %v353 = vsel %vm53, %v296, 0.0
    %v354 = vadd.f32 %v288, %v353
    %v355 = vrot.slane %v354, 4
    %v356 = vadd.f32 %v354, %v355
    %v357 = vrot.slane %v356, 2
    %v358 = vadd.f32 %v356, %v357
    %v359 = vrot.slane %v358, 1
    %v360 = vadd.f32 %v358, %v359
    %v361 = vsub.f32 %v304, %v61
    %v362 = vsub.f32 %v312, %v69
    %v363 = vsub.f32 %v320, %v77
    %v364 = vsub.f32 %v328, %v85
    %v365 = vsub.f32 %v336, %v93
    %v366 = vsub.f32 %v344, %v101
    %v367 = vsub.f32 %v352, %v109
    %v368 = vsub.f32 %v360, %v117
    %v369 = vlog2.pop %v173
    %v370 = vmul.f32 %v369, 0.6931472
    %v371 = vlog2.pop %v181
    %v372 = vmul.f32 %v371, 0.6931472
    %v373 = vlog2.pop %v189
    %v374 = vmul.f32 %v373, 0.6931472
    %v375 = vlog2.pop %v197
    %v376 = vmul.f32 %v375, 0.6931472
    %v377 = vlog2.pop %v205
    %v378 = vmul.f32 %v377, 0.6931472
    %v379 = vlog2.pop %v213
    %v380 = vmul.f32 %v379, 0.6931472
    %v381 = vlog2.pop %v221
    %v382 = vmul.f32 %v381, 0.6931472
    %v383 = vlog2.pop %v229
    %v384 = vmul.f32 %v383, 0.6931472
    %v385 = vsub.f32 %v361, %v370
    %v386 = vsub.f32 %v362, %v372
    %v387 = vsub.f32 %v363, %v374
    %v388 = vsub.f32 %v364, %v376
    %v389 = vsub.f32 %v365, %v378
    %v390 = vsub.f32 %v366, %v380
    %v391 = vsub.f32 %v367, %v382
    %v392 = vsub.f32 %v368, %v384
    %v393 = vmul.f32 %v385, 1.442695
    %v394 = vpow.pop %v393
    %v395 = vmul.f32 %v386, 1.442695
    %v396 = vpow.pop %v395
    %v397 = vmul.f32 %v387, 1.442695
    %v398 = vpow.pop %v397
    %v399 = vmul.f32 %v388, 1.442695
    %v400 = vpow.pop %v399
    %v401 = vmul.f32 %v389, 1.442695
    %v402 = vpow.pop %v401
    %v403 = vmul.f32 %v390, 1.442695
    %v404 = vpow.pop %v403
    %v405 = vmul.f32 %v391, 1.442695
    %v406 = vpow.pop %v405
    %v407 = vmul.f32 %v392, 1.442695
    %v408 = vpow.pop %v407
    %v409 = vsub.f32 1.0, %v394
    %v410 = vsub.f32 1.0, %v396
    %v411 = vsub.f32 1.0, %v398
    %v412 = vsub.f32 1.0, %v400
    %v413 = vsub.f32 1.0, %v402
    %v414 = vsub.f32 1.0, %v404
    %v415 = vsub.f32 1.0, %v406
    %v416 = vsub.f32 1.0, %v408
    %v417 = vsub.f32 0.0, %v52
    %v418 = vmul.f32 %v409, %v409
    %v419 = vmul.f32 %v410, %v410
    %v420 = vmul.f32 %v411, %v411
    %v421 = vmul.f32 %v412, %v412
    %v422 = vmul.f32 %v413, %v413
    %v423 = vmul.f32 %v414, %v414
    %v424 = vmul.f32 %v415, %v415
    %v425 = vmul.f32 %v416, %v416
    %v434 = vcombine.low %v418, %v419
    %v435 = vcombine.low %v420, %v421
    %v436 = vcombine.low %v422, %v423
    %v437 = vcombine.low %v424, %v425
    %v439 = vunpack.c.l.s4 1966171168
    %v440 = vunpack.c.0.s8 %v439
    %v441 = vlaneseq
    %v442 = vshrl.u32 %v441, 7
    %v443 = vsub.s32 %v440, %v442
    %v444 = vrot.slane %v434, %v443
    %v446 = vunpack.c.l.s4 1966171168
    %v447 = vunpack.c.0.s8 %v446
    %v448 = vlaneseq
    %v449 = vshrl.u32 %v448, 7
    %v450 = vsub.s32 %v447, %v449
    %v451 = vrot.slane %v435, %v450
    %v453 = vunpack.c.l.s4 1966171168
    %v454 = vunpack.c.0.s8 %v453
    %v455 = vlaneseq
    %v456 = vshrl.u32 %v455, 7
    %v457 = vsub.s32 %v454, %v456
    %v458 = vrot.slane %v436, %v457
    %v460 = vunpack.c.l.s4 1966171168
    %v461 = vunpack.c.0.s8 %v460
    %v462 = vlaneseq
    %v463 = vshrl.u32 %v462, 7
    %v464 = vsub.s32 %v461, %v463
    %v465 = vrot.slane %v437, %v464
    %v466 = vcombine.low %v444, %v451
    %v467 = vcombine.low %v458, %v465
    %v469 = vunpack.c.l.s4 1966171168
    %v470 = vunpack.c.0.s8 %v469
    %v471 = vlaneseq
    %v472 = vshrl.u32 %v471, 7
    %v473 = vsub.s32 %v470, %v472
    %v474 = vrot.slane %v466, %v473
    %v476 = vunpack.c.l.s4 1966171168
    %v477 = vunpack.c.0.s8 %v476
    %v478 = vlaneseq
    %v479 = vshrl.u32 %v478, 7
    %v480 = vsub.s32 %v477, %v479
    %v481 = vrot.slane %v467, %v480
    %v482 = vcombine.low %v474, %v481
    %v484 = vmul.f32 %v417, %v482
    %v493 = vcombine.low %v385, %v386
    %v494 = vcombine.low %v387, %v388
    %v495 = vcombine.low %v389, %v390
    %v496 = vcombine.low %v391, %v392
    %v498 = vunpack.c.l.s4 1966171168
    %v499 = vunpack.c.0.s8 %v498
    %v500 = vlaneseq
    %v501 = vshrl.u32 %v500, 7
    %v502 = vsub.s32 %v499, %v501
    %v503 = vrot.slane %v493, %v502
    %v505 = vunpack.c.l.s4 1966171168
    %v506 = vunpack.c.0.s8 %v505
    %v507 = vlaneseq
    %v508 = vshrl.u32 %v507, 7
    %v509 = vsub.s32 %v506, %v508
    %v510 = vrot.slane %v494, %v509
    %v512 = vunpack.c.l.s4 1966171168
    %v513 = vunpack.c.0.s8 %v512
    %v514 = vlaneseq
    %v515 = vshrl.u32 %v514, 7
    %v516 = vsub.s32 %v513, %v515
    %v517 = vrot.slane %v495, %v516
    %v519 = vunpack.c.l.s4 1966171168
    %v520 = vunpack.c.0.s8 %v519
    %v521 = vlaneseq
    %v522 = vshrl.u32 %v521, 7
    %v523 = vsub.s32 %v520, %v522
    %v524 = vrot.slane %v496, %v523
    %v525 = vcombine.low %v503, %v510
    %v526 = vcombine.low %v517, %v524
    %v528 = vunpack.c.l.s4 1966171168
    %v529 = vunpack.c.0.s8 %v528
    %v530 = vlaneseq
    %v531 = vshrl.u32 %v530, 7
    %v532 = vsub.s32 %v529, %v531
    %v533 = vrot.slane %v525, %v532
    %v535 = vunpack.c.l.s4 1966171168
    %v536 = vunpack.c.0.s8 %v535
    %v537 = vlaneseq
    %v538 = vshrl.u32 %v537, 7
    %v539 = vsub.s32 %v536, %v538
    %v540 = vrot.slane %v526, %v539
    %v541 = vcombine.low %v533, %v540
    %v543 = vmul.f32 %v484, %v541
    %v544 = vlaneseq
    %v545 = vand.u32 %v544, 127
    %v546 = vadd.s32 %v545, 128
    %v547 = vadd.s32 %v545, 256
    %v548 = vadd.s32 %v545, 384
    %v549 = vadd.s32 %v545, 512
    %v550 = vadd.s32 %v545, 640
    %v551 = vadd.s32 %v545, 768
    %v552 = vadd.s32 %v545, 896
    %s553 = smul.u32 0, 1024
    %v554 = vstv %s553
    %v555 = vadd.s32 %v554, %v545
    %v556 = vadd.s32 %v554, %v546
    %v557 = vadd.s32 %v554, %v547
    %v558 = vadd.s32 %v554, %v548
    %v559 = vadd.s32 %v554, %v549
    %v560 = vadd.s32 %v554, %v550
    %v561 = vadd.s32 %v554, %v551
    %v562 = vadd.s32 %v554, %v552
    %vm563 = vcmp.lt.s32.totalorder %v555, 200
    %vm564 = vcmp.lt.s32.totalorder %v556, 200
    %vm565 = vcmp.lt.s32.totalorder %v557, 200
    %vm566 = vcmp.lt.s32.totalorder %v558, 200
    %vm567 = vcmp.lt.s32.totalorder %v559, 200
    %vm568 = vcmp.lt.s32.totalorder %v560, 200
    %vm569 = vcmp.lt.s32.totalorder %v561, 200
    %vm570 = vcmp.lt.s32.totalorder %v562, 200
    %v572 = vlaneseq
    %v573 = vshrl.u32 %v572, 7
    %v574 = vsub.s32 0, %v573
    %v575 = vrot.slane %v543, %v574
    %v576 = vlaneseq
    %v577 = vshrl.u32 %v576, 7
    %v578 = vsub.s32 1, %v577
    %v579 = vrot.slane %v543, %v578
    %v580 = vlaneseq
    %v581 = vshrl.u32 %v580, 7
    %v582 = vsub.s32 2, %v581
    %v583 = vrot.slane %v543, %v582
    %v584 = vlaneseq
    %v585 = vshrl.u32 %v584, 7
    %v586 = vsub.s32 3, %v585
    %v587 = vrot.slane %v543, %v586
    %v588 = vlaneseq
    %v589 = vshrl.u32 %v588, 7
    %v590 = vsub.s32 4, %v589
    %v591 = vrot.slane %v543, %v590
    %v592 = vlaneseq
    %v593 = vshrl.u32 %v592, 7
    %v594 = vsub.s32 5, %v593
    %v595 = vrot.slane %v543, %v594
    %v596 = vlaneseq
    %v597 = vshrl.u32 %v596, 7
    %v598 = vsub.s32 6, %v597
    %v599 = vrot.slane %v543, %v598
    %v600 = vlaneseq
    %v601 = vshrl.u32 %v600, 7
    %v602 = vsub.s32 7, %v601
    %v603 = vrot.slane %v543, %v602
    %v612 = vsel %vm563, %v575, 0.0
    %v613 = vsel %vm564, %v579, 0.0
    %v614 = vsel %vm565, %v583, 0.0
    %v615 = vsel %vm566, %v587, 0.0
    %v616 = vsel %vm567, %v591, 0.0
    %v617 = vsel %vm568, %v595, 0.0
    %v618 = vsel %vm569, %v599, 0.0
    %v619 = vsel %vm570, %v603, 0.0
    %v620 = vld [vmem:[#allocation2] sm:$0x1]
    %vm621 = vcmask 1040384
    %v622 = vsel %vm621, %v612, 0.0
    %v623 = vsel %vm621, %v613, 0.0
    %v624 = vadd.f32 %v622, %v623
    %v625 = vsel %vm621, %v614, 0.0
    %v626 = vadd.f32 %v624, %v625
    %v627 = vsel %vm621, %v615, 0.0
    %v628 = vadd.f32 %v626, %v627
    %v629 = vsel %vm621, %v616, 0.0
    %v630 = vadd.f32 %v628, %v629
    %v631 = vsel %vm621, %v617, 0.0
    %v632 = vadd.f32 %v630, %v631
    %v633 = vsel %vm621, %v618, 0.0
    %v634 = vadd.f32 %v632, %v633
    %v635 = vsel %vm621, %v619, 0.0
    %v636 = vadd.f32 %v634, %v635
    %637 = vadd.xlane.f32.xlu0 %v636
    %v638 = vpop.xlane.xlu0 %637
    %v639 = vadd.f32 %v620, %v638
    %vm640 = vcmask 0
    %641 = vst.msk [vmem:[#allocation2] sm:$0x1] %vm640, %v639
    // Predicated region
    $region22: #{tpu_custom_call.1} parent=1 // pred_check
      %p642 = pneg %p29
    $region23: #{tpu_custom_call.1} parent=1 // pred_check_branch
      %644 = sbr.rel (%p642) target = $region25
    $region24: #{tpu_custom_call.1} parent=1 // pred_region
      %v645 = vld [vmem:[#allocation2] sm:$0x1]
      %v646 = vmul.f32 %v645, 0.005
      %647 = vst.msk [vmem:[#allocation6] sm:$0x1] %vm640, %v646
    $region25: #{tpu_custom_call.1} parent=1 // pred_fallthru
      _
    // Predicated region
    $region26: #{tpu_custom_call.1} parent=1 // pred_check
      _
    $region27: #{tpu_custom_call.1} parent=1 // pred_check_branch
      %649 = sbr.rel (0) target = $region29
    $region28: #{tpu_custom_call.1} parent=1 // pred_region
      %s651 = ssub.s32 16, 16
      %652 = vsyncadd [#allocation5], %s651
      %s654 = sshll.u32 [#allocation6], 4
      %s655 = int_to_ptr.vmem [resolvable:$true] %s654
      %657 = dma.vmem_to_hbm [thread:$0]  %s655, 16, %s3, [#allocation5]
    $region29: #{tpu_custom_call.1} parent=1 // pred_fallthru
      _
    // Predicated region
    $region30: #{tpu_custom_call.1} parent=1 // pred_check
      _
    $region31: #{tpu_custom_call.1} parent=1 // pred_check_branch
      %659 = sbr.rel (0) target = $region33
    $region32: #{tpu_custom_call.1} parent=1 // pred_region
      %660 = dma.done [#allocation5], 16
    $region33: #{tpu_custom_call.1} parent=1 // pred_fallthru
      _
    %661 = vsyncpa [#allocation4], 1
    %662 = vsyncpa [#allocation5], 1

</llo_original>
